<compile_context>
chip_gen: v5e
topology: v5e:2x2
jax: 0.10.0
libtpu: 0.0.40
codegen_flags: <defaults>
</compile_context>

<pallas_src>
import math

import jax
import jax.numpy as jnp
from jax.experimental import pallas as pl
from jax.experimental.pallas import tpu as pltpu

_LANE = 128
_SMOOTH = 1.0


def _make_dice_kernel(R, Rc, Bt, need_row_mask):
    # Rc is a multiple of 8 whenever the reduction axis is chunked (K > 1);
    # rem > 0 only in the single-step (K == 1) case with a tiny sample.
    G, rem = divmod(Rc, 8)

    def _accumulate(inter_acc, sum_acc, p, t):
        pt = p * t
        ps = p + t
        if G > 0:
            pt_main = pt if rem == 0 else pt[:, : G * 8, :]
            ps_main = ps if rem == 0 else ps[:, : G * 8, :]
            # (Bt, Rc, 128) -> (Bt, G, 8, 128) splits the sublane axis at tile
            # boundaries (layout-preserving); the axis-1 sum is pure vreg adds.
            inter_acc[...] += jnp.sum(pt_main.reshape(Bt, G, 8, _LANE), axis=1)
            sum_acc[...] += jnp.sum(ps_main.reshape(Bt, G, 8, _LANE), axis=1)
        if rem > 0:
            inter_acc[:, :rem, :] += pt[:, G * 8:, :]
            sum_acc[:, :rem, :] += ps[:, G * 8:, :]

    def kernel(p_ref, t_ref, o_ref, inter_acc, sum_acc):
        k = pl.program_id(1)
        nk = pl.num_programs(1)

        @pl.when(k == 0)
        def _():
            inter_acc[...] = jnp.zeros_like(inter_acc)
            sum_acc[...] = jnp.zeros_like(sum_acc)

        # No-op for f32 inputs; upcast for bf16/int inputs.
        # TODO(synk): on v7x with bf16 inputs the ~6 VALU ops/element make this
        # VALU-bound; offloading the Rc reduction to the MXU (ones-vector dot,
        # preferred_element_type=f32) would restore HBM-bound, but is skipped
        # here to keep exact f32 per-element products vs. the reference.
        p = p_ref[...].astype(jnp.float32)
        t = t_ref[...].astype(jnp.float32)

        if need_row_mask:
            # Only the last reduction chunk can overrun the array; pay the
            # iota + where mask there only, keep the hot path unmasked.
            @pl.when(k < nk - 1)
            def _():
                _accumulate(inter_acc, sum_acc, p, t)

            @pl.when(k == nk - 1)
            def _():
                rows_left = R - k * Rc
                row_ids = jax.lax.broadcasted_iota(jnp.int32, p.shape, 1)
                valid = row_ids < rows_left
                _accumulate(inter_acc, sum_acc,
                            jnp.where(valid, p, 0.0),
                            jnp.where(valid, t, 0.0))
        else:
            _accumulate(inter_acc, sum_acc, p, t)

        @pl.when(k == nk - 1)
        def _():
            inter = jnp.sum(inter_acc[...], axis=(1, 2), keepdims=True)  # (Bt,1,1)
            total = jnp.sum(sum_acc[...], axis=(1, 2), keepdims=True)    # (Bt,1,1)
            coeff = (2.0 * inter + _SMOOTH) / (total + _SMOOTH)
            o_ref[...] = jnp.broadcast_to(coeff.reshape(1, Bt, 1), o_ref.shape)

    return kernel


def dice_loss(predicted, target):
    """predicted, target: (B, ...) arrays (any float/int dtype). Scalar f32 loss."""
    assert predicted.shape == target.shape
    B = predicted.shape[0]
    n = math.prod(predicted.shape[1:])

    p = predicted.reshape(B, n)
    t = target.reshape(B, n)

    if n % _LANE != 0:
        # TODO(synk): this pad costs one extra HBM pass over both inputs; a 2-D
        # (B, n) kernel variant with an in-kernel tail-lane mask would avoid it
        # but needs a per-step lane-axis relayout for the reduction. n = C*H*W
        # is lane-aligned in practice, so the simple path is kept for that
        # rare case (zeros do not change any of the sums).
        pad = _LANE - (n % _LANE)
        p = jnp.pad(p, ((0, 0), (0, pad)))
        t = jnp.pad(t, ((0, 0), (0, pad)))
        n = n + pad

    R = n // _LANE
    p = p.reshape(B, R, _LANE)
    t = t.reshape(B, R, _LANE)

    itemsize = jnp.dtype(p.dtype).itemsize
    # ~4 MiB per input block: 2 inputs x 2 pipeline buffers x 4 MiB = 16 MiB of
    # VMEM (plus tiny scratch/output), under the explicit 32 MiB limit below,
    # while amortizing the ~0.35 us per-grid-step cost (biggest effect at
    # v7x's 3.2 TB/s; mild on v6e; harmless on v5e).
    rows_budget = max(8, (((4 << 20) // itemsize) // _LANE) // 8 * 8)

    if R <= rows_budget:
        Rc = R                                    # whole sample per step
        Bt = max(1, min(B, rows_budget // R))     # batch samples per step
        if B >= 2:
            # Keep >= 2 blocks on the "parallel" batch axis so both v7x
            # TensorCores get work; at most one extra tiny step on v5e/v6e.
            Bt = min(Bt, max(1, B // 2))
        K = 1
    else:
        Bt = 1
        Rc = (rows_budget // 8) * 8               # multiple of 8
        K = pl.cdiv(R, Rc)
    KB = pl.cdiv(B, Bt)
    need_row_mask = (R % Rc) != 0

    kernel = _make_dice_kernel(R, Rc, Bt, need_row_mask)

    cost = pl.CostEstimate(
        flops=3 * B * n,
        transcendentals=0,
        bytes_accessed=int(2 * B * n * itemsize + KB * Bt * _LANE * 4),
    )

    out = pl.pallas_call(
        kernel,
        out_shape=jax.ShapeDtypeStruct((KB, Bt, _LANE), jnp.float32),
        grid_spec=pltpu.PrefetchScalarGridSpec(
            num_scalar_prefetch=0,
            grid=(KB, K),                          # reduction axis last
            in_specs=[
                pl.BlockSpec((Bt, Rc, _LANE), lambda b, k: (b, k, 0)),
                pl.BlockSpec((Bt, Rc, _LANE), lambda b, k: (b, k, 0)),
            ],
            out_specs=pl.BlockSpec((1, Bt, _LANE), lambda b, k: (b, 0, 0)),
            scratch_shapes=[
                pltpu.VMEM((Bt, 8, _LANE), jnp.float32),
                pltpu.VMEM((Bt, 8, _LANE), jnp.float32),
            ],
        ),
        compiler_params=pltpu.CompilerParams(
            dimension_semantics=("parallel", "arbitrary"),
            vmem_limit_bytes=32 * 1024 * 1024,
        ),
        cost_estimate=cost,
    )(p, t)

    # When B % Bt != 0 the trailing batch block computes coefficients from
    # unspecified boundary data; those rows are sliced off here before the
    # mean (boundary blocks never fault — their contents are just undefined).
    coeff = out.reshape(KB * Bt, _LANE)[:B, 0]
    return 1.0 - jnp.mean(coeff)


def dice_loss_ref(predicted, target):
    """Pure-JAX reference matching the PyTorch module exactly."""
    B = predicted.shape[0]
    p = predicted.reshape(B, -1).astype(jnp.float32)
    t = target.reshape(B, -1).astype(jnp.float32)
    inter = jnp.sum(p * t, axis=1)
    coeff = (2.0 * inter + _SMOOTH) / (jnp.sum(p, axis=1) + jnp.sum(t, axis=1) + _SMOOTH)
    return 1.0 - jnp.mean(coeff)


if __name__ == "__main__":
    key = jax.random.PRNGKey(0)
    kp, kt = jax.random.split(key)

    # Small shape from the module spec (B, C, H, W).
    B, C, H, W = 2, 4, 16, 16
    predicted = jax.nn.sigmoid(jax.random.normal(kp, (B, C, H, W), jnp.float32))
    target = (jax.random.uniform(kt, (B, C, H, W)) > 0.5).astype(jnp.float32)

    out = jax.block_until_ready(dice_loss(predicted, target))
    ref = jax.block_until_ready(dice_loss_ref(predicted, target))
    assert jnp.allclose(out, ref, rtol=1e-5, atol=1e-6), (out, ref)

    # Native-bf16 path (halves HBM bytes; kernel upcasts in-register).
    out_bf = jax.block_until_ready(
        dice_loss(predicted.astype(jnp.bfloat16), target.astype(jnp.bfloat16)))
    ref_bf = jax.block_until_ready(
        dice_loss_ref(predicted.astype(jnp.bfloat16), target.astype(jnp.bfloat16)))
    assert jnp.allclose(out_bf, ref_bf, rtol=1e-4, atol=1e-5), (out_bf, ref_bf)

    # Larger sample: exercises the chunked reduction (K > 1), last-step row
    # mask, and the >= 2 parallel batch blocks path.
    B2, C2, H2, W2 = 2, 5, 512, 512
    p2 = jax.nn.sigmoid(jax.random.normal(kp, (B2, C2, H2, W2), jnp.float32))
    t2 = (jax.random.uniform(kt, (B2, C2, H2, W2)) > 0.5).astype(jnp.float32)
    out2 = jax.block_until_ready(dice_loss(p2, t2))
    ref2 = jax.block_until_ready(dice_loss_ref(p2, t2))
    assert jnp.allclose(out2, ref2, rtol=1e-4, atol=1e-5), (out2, ref2)

    # Lane-unaligned flattened length (rare fallback path).
    B3, C3, H3, W3 = 2, 3, 5, 7
    p3 = jax.nn.sigmoid(jax.random.normal(kp, (B3, C3, H3, W3), jnp.float32))
    t3 = (jax.random.uniform(kt, (B3, C3, H3, W3)) > 0.5).astype(jnp.float32)
    out3 = jax.block_until_ready(dice_loss(p3, t3))
    ref3 = jax.block_until_ready(dice_loss_ref(p3, t3))
    assert jnp.allclose(out3, ref3, rtol=1e-5, atol=1e-6), (out3, ref3)

    print("KERNEL_OK")
</pallas_src>

<mosaic_0001>
module attributes {stable_mosaic.version = 11 : i64} {
  func.func @kernel(%arg0: i32, %arg1: i32, %arg2: memref<1x8x128xf32, #tpu.memory_space<vmem>>, %arg3: memref<1x8x128xf32, #tpu.memory_space<vmem>>, %arg4: memref<1x1x128xf32, #tpu.memory_space<vmem>>, %arg5: memref<1x8x128xf32, #tpu.memory_space<vmem>>, %arg6: memref<1x8x128xf32, #tpu.memory_space<vmem>>) attributes {dimension_semantics = [#tpu.dimension_semantics<parallel>, #tpu.dimension_semantics<arbitrary>], iteration_bounds = array<i64: 2, 1>, scalar_prefetch = 0 : i64, scratch_operands = 2 : i64, tpu.core_type = #tpu.core_type<tc>, window_params = [{transform_indices = @transform_0, window_bounds = array<i64: 1, 8, 128>}, {transform_indices = @transform_1, window_bounds = array<i64: 1, 8, 128>}, {transform_indices = @transform_2, window_bounds = array<i64: 1, 1, 128>}]} {
    %c0_i32 = arith.constant 0 : i32
    %0 = arith.cmpi eq, %arg1, %c0_i32 : i32
    %1 = arith.extui %0 : i1 to i32
    %c0_i32_0 = arith.constant 0 : i32
    %2 = arith.cmpi ne, %1, %c0_i32_0 : i32
    scf.if %2 {
      %cst_21 = arith.constant 0.000000e+00 : f32
      %20 = vector.broadcast %cst_21 : f32 to vector<1x8x128xf32>
      %c0_22 = arith.constant 0 : index
      %c0_23 = arith.constant 0 : index
      %c0_24 = arith.constant 0 : index
      %21 = vector.load %arg5[%c0_22, %c0_23, %c0_24] : memref<1x8x128xf32, #tpu.memory_space<vmem>>, vector<1x8x128xf32>
      tpu.vector_store %arg5[%c0_22, %c0_23, %c0_24], %20 {strides = array<i32>} : memref<1x8x128xf32, #tpu.memory_space<vmem>>, vector<1x8x128xf32>,
      %cst_25 = arith.constant 0.000000e+00 : f32
      %22 = vector.broadcast %cst_25 : f32 to vector<1x8x128xf32>
      %c0_26 = arith.constant 0 : index
      %c0_27 = arith.constant 0 : index
      %c0_28 = arith.constant 0 : index
      %23 = vector.load %arg6[%c0_26, %c0_27, %c0_28] : memref<1x8x128xf32, #tpu.memory_space<vmem>>, vector<1x8x128xf32>
      tpu.vector_store %arg6[%c0_26, %c0_27, %c0_28], %22 {strides = array<i32>} : memref<1x8x128xf32, #tpu.memory_space<vmem>>, vector<1x8x128xf32>,
    } else {
    }
    %c0 = arith.constant 0 : index
    %c0_1 = arith.constant 0 : index
    %c0_2 = arith.constant 0 : index
    %3 = vector.load %arg2[%c0, %c0_1, %c0_2] : memref<1x8x128xf32, #tpu.memory_space<vmem>>, vector<1x8x128xf32>
    %c0_3 = arith.constant 0 : index
    %c0_4 = arith.constant 0 : index
    %c0_5 = arith.constant 0 : index
    %4 = vector.load %arg3[%c0_3, %c0_4, %c0_5] : memref<1x8x128xf32, #tpu.memory_space<vmem>>, vector<1x8x128xf32>
    %5 = arith.mulf %3, %4 : vector<1x8x128xf32>
    %6 = arith.addf %3, %4 : vector<1x8x128xf32>
    %c0_6 = arith.constant 0 : index
    %c0_7 = arith.constant 0 : index
    %c0_8 = arith.constant 0 : index
    %7 = vector.load %arg5[%c0_6, %c0_7, %c0_8] : memref<1x8x128xf32, #tpu.memory_space<vmem>>, vector<1x8x128xf32>
    %8 = vector.shape_cast %5 : vector<1x8x128xf32> to vector<1x1x8x128xf32>
    %cst = arith.constant dense<0.000000e+00> : vector<1x8x128xf32>
    %9 = vector.multi_reduction <add>, %8, %cst [1] : vector<1x1x8x128xf32> to vector<1x8x128xf32>
    %10 = arith.addf %7, %9 : vector<1x8x128xf32>
    %c0_9 = arith.constant 0 : index
    %c0_10 = arith.constant 0 : index
    %c0_11 = arith.constant 0 : index
    %11 = vector.load %arg5[%c0_9, %c0_10, %c0_11] : memref<1x8x128xf32, #tpu.memory_space<vmem>>, vector<1x8x128xf32>
    tpu.vector_store %arg5[%c0_9, %c0_10, %c0_11], %10 {strides = array<i32>} : memref<1x8x128xf32, #tpu.memory_space<vmem>>, vector<1x8x128xf32>,
    %c0_12 = arith.constant 0 : index
    %c0_13 = arith.constant 0 : index
    %c0_14 = arith.constant 0 : index
    %12 = vector.load %arg6[%c0_12, %c0_13, %c0_14] : memref<1x8x128xf32, #tpu.memory_space<vmem>>, vector<1x8x128xf32>
    %13 = vector.shape_cast %6 : vector<1x8x128xf32> to vector<1x1x8x128xf32>
    %cst_15 = arith.constant dense<0.000000e+00> : vector<1x8x128xf32>
    %14 = vector.multi_reduction <add>, %13, %cst_15 [1] : vector<1x1x8x128xf32> to vector<1x8x128xf32>
    %15 = arith.addf %12, %14 : vector<1x8x128xf32>
    %c0_16 = arith.constant 0 : index
    %c0_17 = arith.constant 0 : index
    %c0_18 = arith.constant 0 : index
    %16 = vector.load %arg6[%c0_16, %c0_17, %c0_18] : memref<1x8x128xf32, #tpu.memory_space<vmem>>, vector<1x8x128xf32>
    tpu.vector_store %arg6[%c0_16, %c0_17, %c0_18], %15 {strides = array<i32>} : memref<1x8x128xf32, #tpu.memory_space<vmem>>, vector<1x8x128xf32>,
    %c0_i32_19 = arith.constant 0 : i32
    %17 = arith.cmpi eq, %arg1, %c0_i32_19 : i32
    %18 = arith.extui %17 : i1 to i32
    %c0_i32_20 = arith.constant 0 : i32
    %19 = arith.cmpi ne, %18, %c0_i32_20 : i32
    scf.if %19 {
      %c0_21 = arith.constant 0 : index
      %c0_22 = arith.constant 0 : index
      %c0_23 = arith.constant 0 : index
      %20 = vector.load %arg5[%c0_21, %c0_22, %c0_23] : memref<1x8x128xf32, #tpu.memory_space<vmem>>, vector<1x8x128xf32>
      %cst_24 = arith.constant dense<0.000000e+00> : vector<1xf32>
      %21 = vector.multi_reduction <add>, %20, %cst_24 [1, 2] : vector<1x8x128xf32> to vector<1xf32>
      %22 = vector.shape_cast %21 : vector<1xf32> to vector<1x1x1xf32>
      %c0_25 = arith.constant 0 : index
      %c0_26 = arith.constant 0 : index
      %c0_27 = arith.constant 0 : index
      %23 = vector.load %arg6[%c0_25, %c0_26, %c0_27] : memref<1x8x128xf32, #tpu.memory_space<vmem>>, vector<1x8x128xf32>
      %cst_28 = arith.constant dense<0.000000e+00> : vector<1xf32>
      %24 = vector.multi_reduction <add>, %23, %cst_28 [1, 2] : vector<1x8x128xf32> to vector<1xf32>
      %25 = vector.shape_cast %24 : vector<1xf32> to vector<1x1x1xf32>
      %cst_29 = arith.constant 2.000000e+00 : f32
      %26 = vector.broadcast %cst_29 : f32 to vector<1x1x1xf32>
      %27 = arith.mulf %26, %22 : vector<1x1x1xf32>
      %cst_30 = arith.constant 1.000000e+00 : f32
      %28 = vector.broadcast %cst_30 : f32 to vector<1x1x1xf32>
      %29 = arith.addf %27, %28 : vector<1x1x1xf32>
      %cst_31 = arith.constant 1.000000e+00 : f32
      %30 = vector.broadcast %cst_31 : f32 to vector<1x1x1xf32>
      %31 = arith.addf %25, %30 : vector<1x1x1xf32>
      %32 = arith.divf %29, %31 : vector<1x1x1xf32>
      %33 = vector.shape_cast %32 : vector<1x1x1xf32> to vector<1x1x1xf32>
      %34 = vector.broadcast %33 : vector<1x1x1xf32> to vector<1x1x128xf32>
      %c0_32 = arith.constant 0 : index
      %c0_33 = arith.constant 0 : index
      %c0_34 = arith.constant 0 : index
      %35 = vector.load %arg4[%c0_32, %c0_33, %c0_34] : memref<1x1x128xf32, #tpu.memory_space<vmem>>, vector<1x1x128xf32>
      tpu.vector_store %arg4[%c0_32, %c0_33, %c0_34], %34 {strides = array<i32>} : memref<1x1x128xf32, #tpu.memory_space<vmem>>, vector<1x1x128xf32>,
    } else {
    }
    return
  }
  func.func @transform_0(%arg0: i32, %arg1: i32) -> (i32, i32, i32) {
    %c0_i32 = arith.constant 0 : i32
    %c0_i32_0 = arith.constant 0 : i32
    return %arg0, %arg1, %c0_i32 : i32, i32, i32
  }
  func.func @transform_1(%arg0: i32, %arg1: i32) -> (i32, i32, i32) {
    %c0_i32 = arith.constant 0 : i32
    %c0_i32_0 = arith.constant 0 : i32
    return %arg0, %arg1, %c0_i32 : i32, i32, i32
  }
  func.func @transform_2(%arg0: i32, %arg1: i32) -> (i32, i32, i32) {
    %c0_i32 = arith.constant 0 : i32
    %c0_i32_0 = arith.constant 0 : i32
    %c0_i32_1 = arith.constant 0 : i32
    return %arg0, %c0_i32, %c0_i32_0 : i32, i32, i32
  }
}

</mosaic_0001>

<llo_original>
// kernel: tpu_custom_call.1
$region0: #{tpu_custom_call.1}
  #allocation0 [shape = 'u32[]', space=smem, size = 0x4, offset = 0x4, fixed_abs, tag = 'smem constant byte address 0x4 - core index']
  #allocation1 [shape = 'u32[72,128]{1,0:T(1,128)}', space=vmem, size = 0x9000, scoped, tag = 'internal scratch']
  #allocation2 [shape = 'f32[1,8,128]{2,1,0:T(8,128)}', space=vmem, size = 0x1000, scoped, tag = 'scratch operand']
  #allocation3 [shape = 'f32[1,8,128]{2,1,0:T(8,128)}', space=vmem, size = 0x1000, scoped, tag = 'scratch operand']
  %s0 = inlined_call_operand.hbm [shape: f32[2,8,128], index: 0, kind: input, shape index: {}]
  %s1 = inlined_call_operand.hbm [shape: f32[2,8,128], index: 1, kind: input, shape index: {}]
  %s2 = inlined_call_operand.hbm [shape: f32[2,1,128], index: 2, kind: output, shape index: {}]
  %s3 = sld [smem:[#allocation0]]
  $region57: #{tpu_custom_call.1} parent=0
    _
  %s5 = ssub.s32 1, %s3
  %s6 = scalar_select 0, %s5, %s3
  $region1: #{tpu_custom_call.1} parent=0
    #allocation4 [shape = 'u8[8192]{0}', space=vmem, size = 0x2000, scoped, tag = 'input window, operand 0']
    #allocation5 [shape = 's32[2]{0}', space=sflag, size = 0x8, scoped, tag = 'scoped memory for tpu_custom_call.1']
    #allocation6 [shape = 's32[2]{0}', space=sflag, size = 0x8, scoped, tag = 'scoped memory for tpu_custom_call.1']
    #allocation7 [shape = 'u8[8192]{0}', space=vmem, size = 0x2000, scoped, tag = 'input window, operand 1']
    #allocation8 [shape = 's32[2]{0}', space=sflag, size = 0x8, scoped, tag = 'scoped memory for tpu_custom_call.1']
    #allocation9 [shape = 'u8[1024]{0}', space=vmem, size = 0x400, scoped, tag = 'output window, operand 0']
    %7 = vsyncpa [#allocation5], 0
    %s8 = scalar_lea.sflag [#allocation5], 1
    %9 = vsyncpa %s8, 0
    %10 = vsyncpa [#allocation8], 0
    %s11 = scalar_lea.sflag [#allocation8], 1
    %12 = vsyncpa %s11, 0
    %13 = vsyncpa [#allocation6], 0
    %s14 = scalar_lea.sflag [#allocation6], 1
    %15 = vsyncpa %s14, 0
    loop: start=0, step=1, limit=4
    $region2: #{tpu_custom_call.1} parent=1 // loop_pre_header
      _
    $region3: #{tpu_custom_call.1} parent=1 // loop_header
      %s17 = sphi 0, %s21
      %p18 = scmp.ge.s32.totalorder %s17, 4
      %s24 = sphi 0, %s36
      %s25 = sphi 0, %s32
      %s26 = sphi 0, %s24
      %s27 = sphi 0, %s25
      %s28 = sphi 0, %s26
      %s29 = sphi 0, %s27
      %s41 = sphi 0, %s43
      %s44 = sphi 0, %s41
      %s45 = sphi 0, %s44
      %s61 = sphi 0, %s45
      %s69 = sphi 0, %s71
      %s72 = sphi 0, %s69
      %s73 = sphi 0, %s72
      %s89 = sphi 0, %s73
      %s95 = sphi 0, %s97
      %s98 = sphi 0, %s95
      %s99 = sphi 0, %s98
      %s115 = sphi 0, %s99
    $region4: #{tpu_custom_call.1} parent=1 // loop_header_branch
      %20 = sbr.rel (%p18) target = $region8
    $region5: #{tpu_custom_call.1} parent=1 // loop_body
      %s22 = ssub.s32 %s17, 1
      %s23 = ssub.s32 %s17, 2
      %s30 = sadd.s32 1, %s25
      %p31 = scmp.ge.s32.totalorder %s30, 1
      %s32 = scalar_select %p31, 0, %s30
      %s33 = sadd.s32 1, %s24
      %s34 = scalar_select %p31, %s33, %s24
      %p35 = scmp.ge.s32.totalorder %s34, 2
      %s36 = scalar_select %p35, 0, %s34
      %s37 = ssub.s32 %s24, %s36
      %s38 = ssub.s32 %s25, %s32
      %s39 = sor.u32 %s37, %s38
      %p40 = scmp.eq.s32.totalorder %s39, 0
      %s42 = sadd.s32 %s41, 1
      %s43 = scalar_select %p40, %s41, %s42
      %p46 = pneg %p40
      %p47 = scmp.eq.s32.totalorder %s17, 1
      %p48 = por %p46, %p47
      %p49 = scmp.ne.s32.totalorder %s41, %s44
      %p50 = scmp.eq.s32.totalorder %s17, 0
      %p51 = por %p49, %p50
      %p52 = scmp.ne.s32.totalorder %s41, %s44
      %p53 = scmp.eq.s32.totalorder %s22, 1
      %p54 = por %p52, %p53
      %p55 = scmp.ne.s32.totalorder %s44, %s45
      %p56 = scmp.eq.s32.totalorder %s22, 0
      %p57 = por %p55, %p56
      %p58 = scmp.ne.s32.totalorder %s44, %s45
      %p59 = scmp.eq.s32.totalorder %s23, 1
      %p60 = por %p58, %p59
      %p62 = scmp.ne.s32.totalorder %s45, %s61
      %p63 = scmp.eq.s32.totalorder %s23, 0
      %p64 = por %p62, %p63
      %s65 = ssub.s32 %s24, %s36
      %s66 = ssub.s32 %s25, %s32
      %s67 = sor.u32 %s65, %s66
      %p68 = scmp.eq.s32.totalorder %s67, 0
      %s70 = sadd.s32 %s69, 1
      %s71 = scalar_select %p68, %s69, %s70
      %p74 = pneg %p68
      %p75 = scmp.eq.s32.totalorder %s17, 1
      %p76 = por %p74, %p75
      %p77 = scmp.ne.s32.totalorder %s69, %s72
      %p78 = scmp.eq.s32.totalorder %s17, 0
      %p79 = por %p77, %p78
      %p80 = scmp.ne.s32.totalorder %s69, %s72
      %p81 = scmp.eq.s32.totalorder %s22, 1
      %p82 = por %p80, %p81
      %p83 = scmp.ne.s32.totalorder %s72, %s73
      %p84 = scmp.eq.s32.totalorder %s22, 0
      %p85 = por %p83, %p84
      %p86 = scmp.ne.s32.totalorder %s72, %s73
      %p87 = scmp.eq.s32.totalorder %s23, 1
      %p88 = por %p86, %p87
      %p90 = scmp.ne.s32.totalorder %s73, %s89
      %p91 = scmp.eq.s32.totalorder %s23, 0
      %p92 = por %p90, %p91
      %s93 = ssub.s32 %s24, %s36
      %p94 = scmp.eq.s32.totalorder %s93, 0
      %s96 = sadd.s32 %s95, 1
      %s97 = scalar_select %p94, %s95, %s96
      %p100 = pneg %p94
      %p101 = scmp.eq.s32.totalorder %s17, 1
      %p102 = por %p100, %p101
      %p103 = scmp.ne.s32.totalorder %s95, %s98
      %p104 = scmp.eq.s32.totalorder %s17, 0
      %p105 = por %p103, %p104
      %p106 = scmp.ne.s32.totalorder %s95, %s98
      %p107 = scmp.eq.s32.totalorder %s22, 1
      %p108 = por %p106, %p107
      %p109 = scmp.ne.s32.totalorder %s98, %s99
      %p110 = scmp.eq.s32.totalorder %s22, 0
      %p111 = por %p109, %p110
      %p112 = scmp.ne.s32.totalorder %s98, %s99
      %p113 = scmp.eq.s32.totalorder %s23, 1
      %p114 = por %p112, %p113
      %p116 = scmp.ne.s32.totalorder %s99, %s115
      %p117 = scmp.eq.s32.totalorder %s23, 0
      %p118 = por %p116, %p117
      %p119 = scmp.le.s32.totalorder 1, %s17
      %p120 = scmp.lt.s32.totalorder %s17, 3
      %p121 = pnand %p119, %p120
      %p122 = pneg %p121
      // Predicated region
      $region9: #{tpu_custom_call.1} parent=5 // pred_check
        _
      $region10: #{tpu_custom_call.1} parent=5 // pred_check_branch
        %124 = sbr.rel (%p121) target = $region12
      $region11: #{tpu_custom_call.1} parent=5 // pred_region
        %s125 = ssub.s32 %s17, 1
      $region12: #{tpu_custom_call.1} parent=5 // pred_fallthru
        _
      %p126 = scmp.lt.s32.totalorder %s17, 2
      // Predicated region
      $region13: #{tpu_custom_call.1} parent=5 // pred_check
        %p127 = pneg %p126
      $region14: #{tpu_custom_call.1} parent=5 // pred_check_branch
        %129 = sbr.rel (%p127) target = $region16
      $region15: #{tpu_custom_call.1} parent=5 // pred_region
        // Predicated region
        $region17: #{tpu_custom_call.1} parent=15 // pred_check
          %p130 = pneg %p51
        $region18: #{tpu_custom_call.1} parent=15 // pred_check_branch
          %132 = sbr.rel (%p130) target = $region20
        $region19: #{tpu_custom_call.1} parent=15 // pred_region
          %s133 = sand.u32 %s41, 1
          %s134 = scalar_lea.sflag [#allocation5], %s133
          %s135 = sand.u32 %s41, 1
          %s136 = smul.addr %s135, 8
          %s137 = scalar_lea.vmem [#allocation4], %s136
          %139 = vsyncadd %s134, 0
          %s140 = sadd.s32 %s25, %s24
          %s141 = smul.addr %s140, 8
          %s142 = scalar_lea.hbm %s0, %s141
          %s144 = sshll.u32 %s142, 4
          %s145 = int_to_ptr.hbm [resolvable:$true] %s144
          %s146 = sshll.u32 %s137, 4
          %s147 = int_to_ptr.vmem [resolvable:$true] %s146
          %149 = dma.hbm_to_vmem [thread:$0]  %s145, 128, %s147, %s134
        $region20: #{tpu_custom_call.1} parent=15 // pred_fallthru
          _
        // Predicated region
        $region21: #{tpu_custom_call.1} parent=15 // pred_check
          %p150 = pneg %p79
        $region22: #{tpu_custom_call.1} parent=15 // pred_check_branch
          %152 = sbr.rel (%p150) target = $region24
        $region23: #{tpu_custom_call.1} parent=15 // pred_region
          %s153 = sand.u32 %s69, 1
          %s154 = scalar_lea.sflag [#allocation8], %s153
          %s155 = sand.u32 %s69, 1
          %s156 = smul.addr %s155, 8
          %s157 = scalar_lea.vmem [#allocation7], %s156
          %159 = vsyncadd %s154, 0
          %s160 = sadd.s32 %s25, %s24
          %s161 = smul.addr %s160, 8
          %s162 = scalar_lea.hbm %s1, %s161
          %s164 = sshll.u32 %s162, 4
          %s165 = int_to_ptr.hbm [resolvable:$true] %s164
          %s166 = sshll.u32 %s157, 4
          %s167 = int_to_ptr.vmem [resolvable:$true] %s166
          %169 = dma.hbm_to_vmem [thread:$0]  %s165, 128, %s167, %s154
        $region24: #{tpu_custom_call.1} parent=15 // pred_fallthru
          _
      $region16: #{tpu_custom_call.1} parent=5 // pred_fallthru
        _
      %p170 = scmp.le.s32.totalorder 1, %s17
      %p171 = scmp.lt.s32.totalorder %s17, 3
      %p172 = pnand %p170, %p171
      %p173 = pneg %p172
      // Predicated region
      $region25: #{tpu_custom_call.1} parent=5 // pred_check
        _
      $region26: #{tpu_custom_call.1} parent=5 // pred_check_branch
        %175 = sbr.rel (%p172) target = $region28
      $region27: #{tpu_custom_call.1} parent=5 // pred_region
        %s176 = ssub.s32 %s17, 1
        %s177 = sand.u32 %s44, 1
        %s178 = scalar_lea.sflag [#allocation5], %s177
        %s179 = sand.u32 %s44, 1
        %s180 = smul.addr %s179, 8
        %s181 = scalar_lea.vmem [#allocation4], %s180
        // Predicated region
        $region29: #{tpu_custom_call.1} parent=27 // pred_check
          %p182 = pneg %p57
        $region30: #{tpu_custom_call.1} parent=27 // pred_check_branch
          %184 = sbr.rel (%p182) target = $region32
        $region31: #{tpu_custom_call.1} parent=27 // pred_region
          %186 = dma.done %s178, 128
        $region32: #{tpu_custom_call.1} parent=27 // pred_fallthru
          _
        %s187 = sand.u32 %s72, 1
        %s188 = scalar_lea.sflag [#allocation8], %s187
        %s189 = sand.u32 %s72, 1
        %s190 = smul.addr %s189, 8
        %s191 = scalar_lea.vmem [#allocation7], %s190
        // Predicated region
        $region33: #{tpu_custom_call.1} parent=27 // pred_check
          %p192 = pneg %p85
        $region34: #{tpu_custom_call.1} parent=27 // pred_check_branch
          %194 = sbr.rel (%p192) target = $region36
        $region35: #{tpu_custom_call.1} parent=27 // pred_region
          %196 = dma.done %s188, 128
        $region36: #{tpu_custom_call.1} parent=27 // pred_fallthru
          _
        %s197 = sand.u32 %s44, 1
        %s198 = scalar_lea.sflag [#allocation5], %s197
        %s199 = sand.u32 %s44, 1
        %s200 = smul.addr %s199, 8
        %s201 = scalar_lea.vmem [#allocation4], %s200
        %p202 = pneg %p57
        %p203 = pneg %p54
        %s204 = sand.u32 %s72, 1
        %s205 = scalar_lea.sflag [#allocation8], %s204
        %s206 = sand.u32 %s72, 1
        %s207 = smul.addr %s206, 8
        %s208 = scalar_lea.vmem [#allocation7], %s207
        %p209 = pneg %p85
        %p210 = pneg %p82
        %p211 = pneg %p111
        %p212 = pneg %p108
        %s213 = sand.u32 %s98, 1
        %s214 = scalar_lea.sflag [#allocation6], %s213
        %s215 = sand.u32 %s98, 1
        %s216 = scalar_lea.vmem [#allocation9], %s215
        %p217 = scmp.eq.s32.totalorder %s27, 0
        // Predicated region
        $region37: #{tpu_custom_call.1} parent=27 // pred_check
          %p218 = pneg %p217
        $region38: #{tpu_custom_call.1} parent=27 // pred_check_branch
          %220 = sbr.rel (%p218) target = $region40
        $region39: #{tpu_custom_call.1} parent=27 // pred_region
          %221 = vst [vmem:[#allocation2] sm:$0xff] 0.0
          %222 = vst [vmem:[#allocation3] sm:$0xff] 0.0
        $region40: #{tpu_custom_call.1} parent=27 // pred_fallthru
          _
        %v223 = vld [vmem:[%s181] sm:$0xff]
        %v224 = vld [vmem:[%s191] sm:$0xff]
        %v225 = vmul.f32 %v223, %v224
        %v226 = vadd.f32 %v223, %v224
        %v227 = vld [vmem:[#allocation2] sm:$0xff]
        %v228 = vadd.f32 %v225, 0.0
        %v229 = vadd.f32 %v227, %v228
        %230 = vst [vmem:[#allocation2] sm:$0xff] %v229
        %v231 = vld [vmem:[#allocation3] sm:$0xff]
        %v232 = vadd.f32 %v226, 0.0
        %v233 = vadd.f32 %v231, %v232
        %234 = vst [vmem:[#allocation3] sm:$0xff] %v233
        // Predicated region
        $region41: #{tpu_custom_call.1} parent=27 // pred_check
          %p235 = pneg %p217
        $region42: #{tpu_custom_call.1} parent=27 // pred_check_branch
          %237 = sbr.rel (%p235) target = $region44
        $region43: #{tpu_custom_call.1} parent=27 // pred_region
          %v238 = vld [vmem:[#allocation2] sm:$0xff]
          %239 = vadd.xlane.f32.xlu0 %v238
          %v240 = vpop.xlane.xlu0 %239
          %v241 = vrot.slane %v240, 4
          %v242 = vadd.f32 %v240, %v241
          %v243 = vrot.slane %v242, 2
          %v244 = vadd.f32 %v242, %v243
          %v245 = vrot.slane %v244, 1
          %v246 = vadd.f32 %v244, %v245
          %v247 = vld [vmem:[#allocation3] sm:$0xff]
          %248 = vadd.xlane.f32.xlu0 %v247
          %v249 = vpop.xlane.xlu0 %248
          %v250 = vrot.slane %v249, 4
          %v251 = vadd.f32 %v249, %v250
          %v252 = vrot.slane %v251, 2
          %v253 = vadd.f32 %v251, %v252
          %v254 = vrot.slane %v253, 1
          %v255 = vadd.f32 %v253, %v254
          %v256 = vmul.f32 %v246, 2.0
          %v257 = vadd.f32 %v256, 1.0
          %v258 = vadd.f32 %v255, 1.0
          %v259 = vrcp.pop %v258
          %v260 = vmul.f32 %v258, %v259
          %v261 = vsub.f32 1.0, %v260
          %v262 = vmul.f32 %v259, %v261
          %v263 = vadd.f32 %v259, %v262
          %vm264 = vweird.f32 %v258
          %vm265 = vweird.f32 %v259
          %vm266 = vmor %vm264, %vm265
          %v267 = vsel %vm266, %v259, %v263
          %v268 = vand.u32 2147483647, %v258
          %vm269 = vcmp.eq.f32.partialorder %v268, 8.507059e+37
          %v270 = vand.u32 %v258, 2147483648
          %v271 = vor.u32 1.1754944e-38, %v270
          %v272 = vsel %vm269, %v271, %v267
          %v273 = vmul.f32 %v257, %v272
          %274 = vst [vmem:[%s216] sm:$0x1] %v273
        $region44: #{tpu_custom_call.1} parent=27 // pred_fallthru
          _
        %s275 = sand.u32 %s98, 1
        %s276 = scalar_lea.sflag [#allocation6], %s275
        %s277 = sand.u32 %s98, 1
        %s278 = scalar_lea.vmem [#allocation9], %s277
        // Predicated region
        $region45: #{tpu_custom_call.1} parent=27 // pred_check
          %p279 = pneg %p108
        $region46: #{tpu_custom_call.1} parent=27 // pred_check_branch
          %281 = sbr.rel (%p279) target = $region48
        $region47: #{tpu_custom_call.1} parent=27 // pred_region
          %283 = vsyncadd %s276, 0
          %s284 = scalar_lea.hbm %s2, %s26
          %s286 = sshll.u32 %s278, 4
          %s287 = int_to_ptr.vmem [resolvable:$true] %s286
          %s288 = sshll.u32 %s284, 4
          %s289 = int_to_ptr.hbm [resolvable:$true] %s288
          %291 = dma.vmem_to_hbm [thread:$0]  %s287, 16, %s289, %s276
        $region48: #{tpu_custom_call.1} parent=27 // pred_fallthru
          _
      $region28: #{tpu_custom_call.1} parent=5 // pred_fallthru
        _
      %p292 = scmp.le.s32.totalorder 2, %s17
      // Predicated region
      $region49: #{tpu_custom_call.1} parent=5 // pred_check
        %p293 = pneg %p292
      $region50: #{tpu_custom_call.1} parent=5 // pred_check_branch
        %295 = sbr.rel (%p293) target = $region52
      $region51: #{tpu_custom_call.1} parent=5 // pred_region
        %s296 = ssub.s32 %s17, 2
        // Predicated region
        $region53: #{tpu_custom_call.1} parent=51 // pred_check
          %p297 = pneg %p114
        $region54: #{tpu_custom_call.1} parent=51 // pred_check_branch
          %299 = sbr.rel (%p297) target = $region56
        $region55: #{tpu_custom_call.1} parent=51 // pred_region
          %s300 = sand.u32 %s99, 1
          %s301 = scalar_lea.sflag [#allocation6], %s300
          %s302 = sand.u32 %s99, 1
          %s303 = scalar_lea.vmem [#allocation9], %s302
          %305 = dma.done %s301, 16
        $region56: #{tpu_custom_call.1} parent=51 // pred_fallthru
          _
      $region52: #{tpu_custom_call.1} parent=5 // pred_fallthru
        _
    $region6: #{tpu_custom_call.1} parent=1 // loop_footer
      %s21 = sadd.s32 1, %s17
    $region7: #{tpu_custom_call.1} parent=1 // loop_footer_branch
      %16 = sbr.rel target = $region3
    $region8: #{tpu_custom_call.1} parent=1 // loop_exit
      _
    %306 = vsyncpa [#allocation5], 1
    %s307 = scalar_lea.sflag [#allocation5], 1
    %308 = vsyncpa %s307, 1
    %309 = vsyncpa [#allocation8], 1
    %s310 = scalar_lea.sflag [#allocation8], 1
    %311 = vsyncpa %s310, 1
    %312 = vsyncpa [#allocation6], 1
    %s313 = scalar_lea.sflag [#allocation6], 1
    %314 = vsyncpa %s313, 1

</llo_original>
